<compile_context>
chip_gen: v5e
topology: v5e:2x2
jax: 0.10.0
libtpu: 0.0.40
codegen_flags: <defaults>
</compile_context>

<pallas_src>
import functools

import jax
import jax.numpy as jnp
from jax.experimental import pallas as pl
from jax.experimental.pallas import tpu as pltpu


# ----------------------------------------------------------------------------- kernels

def _conv_bias_kernel(w_ref, x_ref, out_ref):
    # w_ref: (Cout, K+1) resident weights (+bias column)
    # x_ref: (K+1, tile_n) im2col tile (+ones row)
    # out_ref: (Cout, tile_n) lane-dense output tile
    out_ref[...] = jnp.dot(
        w_ref[...], x_ref[...], preferred_element_type=jnp.float32
    )


def _bn_relu_kernel(x_ref, out_ref, *, eps):
    # x_ref / out_ref: (C, N) with N = B*D*H*W on the lane axis.
    x = x_ref[...]
    mean = jnp.mean(x, axis=-1, keepdims=True)            # per-channel mean over (B,D,H,W)
    centered = x - mean
    var = jnp.mean(centered * centered, axis=-1, keepdims=True)  # biased variance
    inv = jax.lax.rsqrt(var + eps)
    out_ref[...] = jnp.maximum(centered * inv, 0.0)


def _maxpool_kernel(x_ref, out_ref):
    # x_ref: (8, tile_m) -- the 8 elements of each 2x2x2 window on the sublane axis.
    out_ref[...] = jnp.max(x_ref[...], axis=0, keepdims=True)


# ----------------------------------------------------------------------------- wrappers

def _conv3d_3x3x3(x, w, b, *, tile_n=2048):
    """x: (B, Cin, D, H, W), w: (Cout, Cin, 3, 3, 3), b: (Cout,).
    Returns conv output in matmul layout (Cout, B*D*H*W), float32."""
    B, Cin, D, H, W = x.shape
    Cout = w.shape[0]
    N = B * D * H * W
    K = Cin * 27

    # im2col over the 27 taps (layout plumbing in the wrapper).
    xp = jnp.pad(x, ((0, 0), (0, 0), (1, 1), (1, 1), (1, 1)))
    taps = [
        xp[:, :, kd:kd + D, kh:kh + H, kw:kw + W]
        for kd in range(3) for kh in range(3) for kw in range(3)
    ]
    xt = jnp.stack(taps, axis=0)                    # (27, B, Cin, D, H, W)
    xt = jnp.transpose(xt, (2, 0, 1, 3, 4, 5))      # (Cin, 27, B, D, H, W)
    xcol = xt.reshape(K, N).astype(jnp.float32)
    xcol = jnp.concatenate([xcol, jnp.ones((1, N), jnp.float32)], axis=0)   # (K+1, N)

    wmat = w.reshape(Cout, K).astype(jnp.float32)
    wmat = jnp.concatenate(
        [wmat, b.reshape(Cout, 1).astype(jnp.float32)], axis=1)             # (Cout, K+1)

    # 128-aligned lane tiles; small problems fall back to one block covering all of N.
    if N % tile_n != 0 or N < tile_n:
        tile_n = N
    grid = (N // tile_n,)

    out = pl.pallas_call(
        _conv_bias_kernel,
        out_shape=jax.ShapeDtypeStruct((Cout, N), jnp.float32),
        grid_spec=pltpu.PrefetchScalarGridSpec(
            num_scalar_prefetch=0,
            grid=grid,
            in_specs=[
                pl.BlockSpec((Cout, K + 1), lambda i: (0, 0)),   # weights stay resident
                pl.BlockSpec((K + 1, tile_n), lambda i: (0, i)),
            ],
            out_specs=pl.BlockSpec((Cout, tile_n), lambda i: (0, i)),
        ),
        compiler_params=pltpu.CompilerParams(
            dimension_semantics=("parallel",)
        ),
    )(wmat, xcol)
    return out  # (Cout, N)


def _bn_relu(y, *, eps=1e-5):
    """y: (C, N) conv output in matmul layout. Per-channel BN (training stats) + ReLU."""
    # TODO(synk): for production-size volumes split this into a tiled stats pass +
    # tiled apply pass; at these shapes the full (C, N) slab fits VMEM comfortably.
    C, N = y.shape
    return pl.pallas_call(
        functools.partial(_bn_relu_kernel, eps=eps),
        out_shape=jax.ShapeDtypeStruct((C, N), jnp.float32),
        grid_spec=pltpu.PrefetchScalarGridSpec(
            num_scalar_prefetch=0,
            grid=(1,),
            in_specs=[pl.BlockSpec((C, N), lambda i: (0, 0))],
            out_specs=pl.BlockSpec((C, N), lambda i: (0, 0)),
        ),
    )(y)


def _maxpool3d_2(x, *, tile_m=2048):
    """x: (B, C, D, H, W) with even D, H, W. MaxPool3d((2,2,2)), stride (2,2,2)."""
    B, C, D, H, W = x.shape
    D2, H2, W2 = D // 2, H // 2, W // 2
    M = B * C * D2 * H2 * W2

    views = [
        x[:, :, di::2, hi::2, wi::2].reshape(1, M)
        for di in range(2) for hi in range(2) for wi in range(2)
    ]
    xs = jnp.concatenate(views, axis=0).astype(jnp.float32)   # (8, M)

    if M % tile_m != 0 or M < tile_m:
        tile_m = M
    grid = (M // tile_m,)

    out = pl.pallas_call(
        _maxpool_kernel,
        out_shape=jax.ShapeDtypeStruct((1, M), jnp.float32),
        grid_spec=pltpu.PrefetchScalarGridSpec(
            num_scalar_prefetch=0,
            grid=grid,
            in_specs=[pl.BlockSpec((8, tile_m), lambda i: (0, i))],
            out_specs=pl.BlockSpec((1, tile_m), lambda i: (0, i)),
        ),
        compiler_params=pltpu.CompilerParams(
            dimension_semantics=("parallel",)
        ),
    )(xs)
    return out.reshape(B, C, D2, H2, W2)


def custom_encoder_block_forward(x, params, *, eps=1e-5):
    """Returns (x_features, pooled) exactly like custom_encoder_block.forward."""
    w1, b1 = params["w1"], params["b1"]
    w2, b2 = params["w2"], params["b2"]
    B, Cin, D, H, W = x.shape
    Cout = w1.shape[0]

    y = _conv3d_3x3x3(x, w1, b1)                 # (Cout, N)
    y = _bn_relu(y, eps=eps)                     # (Cout, N)
    y5 = y.reshape(Cout, B, D, H, W).transpose(1, 0, 2, 3, 4)   # (B, Cout, D, H, W)

    z = _conv3d_3x3x3(y5, w2, b2)                # (Cout, N)
    z = _bn_relu(z, eps=eps)                     # (Cout, N)
    x_out = z.reshape(Cout, B, D, H, W).transpose(1, 0, 2, 3, 4)

    p = _maxpool3d_2(x_out)
    return x_out, p


# ----------------------------------------------------------------------------- reference

def _ref_forward(x, params, eps=1e-5):
    def conv3d(inp, w, b):
        y = jax.lax.conv_general_dilated(
            inp, w, window_strides=(1, 1, 1), padding=[(1, 1)] * 3,
            dimension_numbers=("NCDHW", "OIDHW", "NCDHW"),
            precision=jax.lax.Precision.HIGHEST)
        return y + b.reshape(1, -1, 1, 1, 1)

    def bn_relu(t):
        mean = jnp.mean(t, axis=(0, 2, 3, 4), keepdims=True)
        var = jnp.mean((t - mean) ** 2, axis=(0, 2, 3, 4), keepdims=True)
        return jnp.maximum((t - mean) * jax.lax.rsqrt(var + eps), 0.0)

    y = bn_relu(conv3d(x, params["w1"], params["b1"]))
    y = bn_relu(conv3d(y, params["w2"], params["b2"]))
    B, C, D, H, W = y.shape
    p = y.reshape(B, C, D // 2, 2, H // 2, 2, W // 2, 2).max(axis=(3, 5, 7))
    return y, p


if __name__ == "__main__":
    key = jax.random.PRNGKey(0)
    kx, kw1, kb1, kw2, kb2 = jax.random.split(key, 5)

    B, Cin, Cout, D, H, W = 2, 2, 4, 16, 16, 16
    x = jax.random.normal(kx, (B, Cin, D, H, W), dtype=jnp.float32)
    params = {
        "w1": 0.1 * jax.random.normal(kw1, (Cout, Cin, 3, 3, 3), dtype=jnp.float32),
        "b1": 0.1 * jax.random.normal(kb1, (Cout,), dtype=jnp.float32),
        "w2": 0.1 * jax.random.normal(kw2, (Cout, Cout, 3, 3, 3), dtype=jnp.float32),
        "b2": 0.1 * jax.random.normal(kb2, (Cout,), dtype=jnp.float32),
    }

    x_out, p_out = jax.block_until_ready(custom_encoder_block_forward(x, params))
    x_ref, p_ref = jax.block_until_ready(_ref_forward(x, params))

    assert x_out.shape == (B, Cout, D, H, W), x_out.shape
    assert p_out.shape == (B, Cout, D // 2, H // 2, W // 2), p_out.shape
    assert jnp.allclose(x_out, x_ref, rtol=2e-2, atol=2e-2), float(
        jnp.max(jnp.abs(x_out - x_ref)))
    assert jnp.allclose(p_out, p_ref, rtol=2e-2, atol=2e-2), float(
        jnp.max(jnp.abs(p_out - p_ref)))
    print("KERNEL_OK")
</pallas_src>

<mosaic_0001>
module attributes {stable_mosaic.version = 11 : i64} {
  func.func @_conv_bias_kernel(%arg0: i32, %arg1: memref<4x55xf32, #tpu.memory_space<vmem>>, %arg2: memref<55x2048xf32, #tpu.memory_space<vmem>>, %arg3: memref<4x2048xf32, #tpu.memory_space<vmem>>) attributes {dimension_semantics = [#tpu.dimension_semantics<parallel>], iteration_bounds = array<i64: 4>, scalar_prefetch = 0 : i64, scratch_operands = 0 : i64, tpu.core_type = #tpu.core_type<tc>, window_params = [{pipeline_mode = #tpu.pipeline_mode<synchronous>, transform_indices = @transform_0, window_bounds = array<i64: 4, 55>}, {transform_indices = @transform_1, window_bounds = array<i64: 55, 2048>}, {transform_indices = @transform_2, window_bounds = array<i64: 4, 2048>}]} {
    %c0 = arith.constant 0 : index
    %c0_0 = arith.constant 0 : index
    %0 = vector.load %arg1[%c0, %c0_0] : memref<4x55xf32, #tpu.memory_space<vmem>>, vector<4x55xf32>
    %c0_1 = arith.constant 0 : index
    %c0_2 = arith.constant 0 : index
    %1 = vector.load %arg2[%c0_1, %c0_2] : memref<55x2048xf32, #tpu.memory_space<vmem>>, vector<55x2048xf32>
    %cst = arith.constant dense<0.000000e+00> : vector<4x2048xf32>
    %2 = tpu.matmul %0, %1, %cst {dimension_numbers = #tpu.dot_dimension_numbers<[1], [0], [0], [1], [0, 0, 1, 1], [], []>} : vector<4x55xf32>, vector<55x2048xf32>, vector<4x2048xf32> -> vector<4x2048xf32>
    %c0_3 = arith.constant 0 : index
    %c0_4 = arith.constant 0 : index
    %3 = vector.load %arg3[%c0_3, %c0_4] : memref<4x2048xf32, #tpu.memory_space<vmem>>, vector<4x2048xf32>
    tpu.vector_store %arg3[%c0_3, %c0_4], %2 {strides = array<i32>} : memref<4x2048xf32, #tpu.memory_space<vmem>>, vector<4x2048xf32>,
    return
  }
  func.func @transform_0(%arg0: i32) -> (i32, i32) {
    %c0_i32 = arith.constant 0 : i32
    %c0_i32_0 = arith.constant 0 : i32
    %c0_i32_1 = arith.constant 0 : i32
    return %c0_i32, %c0_i32_0 : i32, i32
  }
  func.func @transform_1(%arg0: i32) -> (i32, i32) {
    %c0_i32 = arith.constant 0 : i32
    %c0_i32_0 = arith.constant 0 : i32
    return %c0_i32, %arg0 : i32, i32
  }
  func.func @transform_2(%arg0: i32) -> (i32, i32) {
    %c0_i32 = arith.constant 0 : i32
    %c0_i32_0 = arith.constant 0 : i32
    return %c0_i32, %arg0 : i32, i32
  }
}

</mosaic_0001>

<llo_original>
// kernel: tpu_custom_call.1
$region0: #{tpu_custom_call.1}
  #allocation0 [shape = 'u32[]', space=smem, size = 0x4, offset = 0x4, fixed_abs, tag = 'smem constant byte address 0x4 - core index']
  #allocation1 [shape = 'u32[72,128]{1,0:T(1,128)}', space=vmem, size = 0x9000, scoped, tag = 'internal scratch']
  %s0 = inlined_call_operand.hbm [shape: f32[4,55], index: 0, kind: input, shape index: {}]
  %s1 = inlined_call_operand.hbm [shape: f32[55,8192], index: 1, kind: input, shape index: {}]
  %s2 = inlined_call_operand.hbm [shape: f32[4,8192], index: 2, kind: output, shape index: {}]
  %s3 = sld [smem:[#allocation0]]
  $region49: #{tpu_custom_call.1} parent=0
    _
  %s5 = ssub.s32 1, %s3
  %s6 = scalar_select 0, %s5, %s3
  $region1: #{tpu_custom_call.1} parent=0
    #allocation2 [shape = 'u8[2048]{0}', space=vmem, size = 0x800, scoped, tag = 'input window, operand 0, single buffered']
    #allocation3 [shape = 's32[2]{0}', space=sflag, size = 0x8, scoped, tag = 'scoped memory for tpu_custom_call.1']
    #allocation4 [shape = 's32[2]{0}', space=sflag, size = 0x8, scoped, tag = 'scoped memory for tpu_custom_call.1']
    #allocation5 [shape = 'u8[917504]{0}', space=vmem, size = 0xe0000, scoped, tag = 'input window, operand 1']
    #allocation6 [shape = 's32[2]{0}', space=sflag, size = 0x8, scoped, tag = 'scoped memory for tpu_custom_call.1']
    #allocation7 [shape = 'u8[65536]{0}', space=vmem, size = 0x10000, scoped, tag = 'output window, operand 0']
    %7 = vsyncpa [#allocation3], 0
    %8 = vsyncpa [#allocation6], 0
    %s9 = scalar_lea.sflag [#allocation6], 1
    %10 = vsyncpa %s9, 0
    %11 = vsyncpa [#allocation4], 0
    %s12 = scalar_lea.sflag [#allocation4], 1
    %13 = vsyncpa %s12, 0
    loop: start=0, step=1, limit=6
    $region2: #{tpu_custom_call.1} parent=1 // loop_pre_header
      _
    $region3: #{tpu_custom_call.1} parent=1 // loop_header
      %s15 = sphi 0, %s19
      %p16 = scmp.ge.s32.totalorder %s15, 6
      %s23 = sphi 0, %s23
      %s25 = sphi 0, %s23
      %s26 = sphi 0, %s25
      %s40 = sphi 0, %s26
      %s46 = sphi 0, %s48
      %s49 = sphi 0, %s46
      %s50 = sphi 0, %s49
      %s66 = sphi 0, %s50
      %s72 = sphi 0, %s74
      %s75 = sphi 0, %s72
      %s76 = sphi 0, %s75
      %s92 = sphi 0, %s76
    $region4: #{tpu_custom_call.1} parent=1 // loop_header_branch
      %18 = sbr.rel (%p16) target = $region8
    $region5: #{tpu_custom_call.1} parent=1 // loop_body
      %s20 = ssub.s32 %s15, 1
      %s21 = ssub.s32 %s15, 2
      %s22 = sadd.s32 %s15, 1
      %s24 = sadd.s32 %s23, 1
      %p27 = scmp.eq.s32.totalorder %s15, 3
      %p28 = scmp.ne.s32.totalorder %s23, %s25
      %p29 = scmp.eq.s32.totalorder %s15, 0
      %p30 = por %p28, %p29
      %p31 = scmp.ne.s32.totalorder %s23, %s25
      %p32 = scmp.eq.s32.totalorder %s20, 3
      %p33 = por %p31, %p32
      %p34 = scmp.ne.s32.totalorder %s25, %s26
      %p35 = scmp.eq.s32.totalorder %s20, 0
      %p36 = por %p34, %p35
      %p37 = scmp.ne.s32.totalorder %s25, %s26
      %p38 = scmp.eq.s32.totalorder %s21, 3
      %p39 = por %p37, %p38
      %p41 = scmp.ne.s32.totalorder %s26, %s40
      %p42 = scmp.eq.s32.totalorder %s21, 0
      %p43 = por %p41, %p42
      %s44 = ssub.s32 %s15, %s22
      %p45 = scmp.eq.s32.totalorder %s44, 0
      %s47 = sadd.s32 %s46, 1
      %s48 = scalar_select %p45, %s46, %s47
      %p51 = pneg %p45
      %p52 = scmp.eq.s32.totalorder %s15, 3
      %p53 = por %p51, %p52
      %p54 = scmp.ne.s32.totalorder %s46, %s49
      %p55 = scmp.eq.s32.totalorder %s15, 0
      %p56 = por %p54, %p55
      %p57 = scmp.ne.s32.totalorder %s46, %s49
      %p58 = scmp.eq.s32.totalorder %s20, 3
      %p59 = por %p57, %p58
      %p60 = scmp.ne.s32.totalorder %s49, %s50
      %p61 = scmp.eq.s32.totalorder %s20, 0
      %p62 = por %p60, %p61
      %p63 = scmp.ne.s32.totalorder %s49, %s50
      %p64 = scmp.eq.s32.totalorder %s21, 3
      %p65 = por %p63, %p64
      %p67 = scmp.ne.s32.totalorder %s50, %s66
      %p68 = scmp.eq.s32.totalorder %s21, 0
      %p69 = por %p67, %p68
      %s70 = ssub.s32 %s15, %s22
      %p71 = scmp.eq.s32.totalorder %s70, 0
      %s73 = sadd.s32 %s72, 1
      %s74 = scalar_select %p71, %s72, %s73
      %p77 = pneg %p71
      %p78 = scmp.eq.s32.totalorder %s15, 3
      %p79 = por %p77, %p78
      %p80 = scmp.ne.s32.totalorder %s72, %s75
      %p81 = scmp.eq.s32.totalorder %s15, 0
      %p82 = por %p80, %p81
      %p83 = scmp.ne.s32.totalorder %s72, %s75
      %p84 = scmp.eq.s32.totalorder %s20, 3
      %p85 = por %p83, %p84
      %p86 = scmp.ne.s32.totalorder %s75, %s76
      %p87 = scmp.eq.s32.totalorder %s20, 0
      %p88 = por %p86, %p87
      %p89 = scmp.ne.s32.totalorder %s75, %s76
      %p90 = scmp.eq.s32.totalorder %s21, 3
      %p91 = por %p89, %p90
      %p93 = scmp.ne.s32.totalorder %s76, %s92
      %p94 = scmp.eq.s32.totalorder %s21, 0
      %p95 = por %p93, %p94
      %p96 = scmp.le.s32.totalorder 1, %s15
      %p97 = scmp.lt.s32.totalorder %s15, 5
      %p98 = pnand %p96, %p97
      %p99 = pneg %p98
      // Predicated region
      $region9: #{tpu_custom_call.1} parent=5 // pred_check
        _
      $region10: #{tpu_custom_call.1} parent=5 // pred_check_branch
        %101 = sbr.rel (%p98) target = $region12
      $region11: #{tpu_custom_call.1} parent=5 // pred_region
        %s102 = ssub.s32 %s15, 1
        // Predicated region
        $region13: #{tpu_custom_call.1} parent=11 // pred_check
          %p103 = pneg %p36
        $region14: #{tpu_custom_call.1} parent=11 // pred_check_branch
          %105 = sbr.rel (%p103) target = $region16
        $region15: #{tpu_custom_call.1} parent=11 // pred_region
          %107 = vsyncadd [#allocation3], 0
          %s109 = sshll.u32 %s0, 4
          %s110 = int_to_ptr.hbm [resolvable:$true] %s109
          %s111 = sshll.u32 [#allocation2], 4
          %s112 = int_to_ptr.vmem [resolvable:$true] %s111
          %114 = dma.hbm_to_vmem [thread:$0]  %s110, 64, %s112, [#allocation3]
        $region16: #{tpu_custom_call.1} parent=11 // pred_fallthru
          _
      $region12: #{tpu_custom_call.1} parent=5 // pred_fallthru
        _
      %p115 = scmp.lt.s32.totalorder %s15, 4
      // Predicated region
      $region17: #{tpu_custom_call.1} parent=5 // pred_check
        %p116 = pneg %p115
      $region18: #{tpu_custom_call.1} parent=5 // pred_check_branch
        %118 = sbr.rel (%p116) target = $region20
      $region19: #{tpu_custom_call.1} parent=5 // pred_region
        // Predicated region
        $region21: #{tpu_custom_call.1} parent=19 // pred_check
          %p119 = pneg %p56
        $region22: #{tpu_custom_call.1} parent=19 // pred_check_branch
          %121 = sbr.rel (%p119) target = $region24
        $region23: #{tpu_custom_call.1} parent=19 // pred_region
          %s122 = sand.u32 %s46, 1
          %s123 = scalar_lea.sflag [#allocation6], %s122
          %s124 = sand.u32 %s46, 1
          %s125 = smul.addr %s124, 896
          %s126 = scalar_lea.vmem [#allocation5], %s125
          %s127 = smul.u32 16, %s15
          %129 = vsyncadd %s123, 0
          %s130 = smul.addr %s127, 8
          %s131 = scalar_lea.hbm %s1, %s130
          %s132 = sshll.u32 %s131, 4
          %s133 = int_to_ptr.hbm [resolvable:$true] %s132
          %s134 = sshll.u32 %s126, 4
          %s135 = int_to_ptr.vmem [resolvable:$true] %s134
          %140 = dma.hbm_to_vmem [thread:$0]  %s133, 14336, %s135, %s123, 8192, 2048, 128
        $region24: #{tpu_custom_call.1} parent=19 // pred_fallthru
          _
      $region20: #{tpu_custom_call.1} parent=5 // pred_fallthru
        _
      %p141 = scmp.le.s32.totalorder 1, %s15
      %p142 = scmp.lt.s32.totalorder %s15, 5
      %p143 = pnand %p141, %p142
      %p144 = pneg %p143
      // Predicated region
      $region25: #{tpu_custom_call.1} parent=5 // pred_check
        _
      $region26: #{tpu_custom_call.1} parent=5 // pred_check_branch
        %146 = sbr.rel (%p143) target = $region28
      $region27: #{tpu_custom_call.1} parent=5 // pred_region
        %s147 = ssub.s32 %s15, 1
        // Predicated region
        $region29: #{tpu_custom_call.1} parent=27 // pred_check
          %p148 = pneg %p36
        $region30: #{tpu_custom_call.1} parent=27 // pred_check_branch
          %150 = sbr.rel (%p148) target = $region32
        $region31: #{tpu_custom_call.1} parent=27 // pred_region
          %152 = dma.done [#allocation3], 64
        $region32: #{tpu_custom_call.1} parent=27 // pred_fallthru
          _
        %s153 = sand.u32 %s49, 1
        %s154 = scalar_lea.sflag [#allocation6], %s153
        %s155 = sand.u32 %s49, 1
        %s156 = smul.addr %s155, 896
        %s157 = scalar_lea.vmem [#allocation5], %s156
        // Predicated region
        $region33: #{tpu_custom_call.1} parent=27 // pred_check
          %p158 = pneg %p62
        $region34: #{tpu_custom_call.1} parent=27 // pred_check_branch
          %160 = sbr.rel (%p158) target = $region36
        $region35: #{tpu_custom_call.1} parent=27 // pred_region
          %162 = dma.done %s154, 14336
        $region36: #{tpu_custom_call.1} parent=27 // pred_fallthru
          _
        %p163 = pneg %p36
        %p164 = pneg %p33
        %s165 = sand.u32 %s49, 1
        %s166 = scalar_lea.sflag [#allocation6], %s165
        %s167 = sand.u32 %s49, 1
        %s168 = smul.addr %s167, 896
        %s169 = scalar_lea.vmem [#allocation5], %s168
        %p170 = pneg %p62
        %p171 = pneg %p59
        %p172 = pneg %p88
        %p173 = pneg %p85
        %s174 = sand.u32 %s75, 1
        %s175 = scalar_lea.sflag [#allocation4], %s174
        %s176 = sand.u32 %s75, 1
        %s177 = smul.addr %s176, 64
        %s178 = scalar_lea.vmem [#allocation7], %s177
        %s179 = smul.u32 16, %s20
        %s180 = smul.u32 16, %s20
        %v181 = vld [vmem:[#allocation2] sm:$0xf]
        %v182 = vld [vmem:[%s157] sm:$0xff]
        %v183 = vld [vmem:[%s157 + $0x8] sm:$0xff]
        %v184 = vld [vmem:[%s157 + $0x10] sm:$0xff]
        %v185 = vld [vmem:[%s157 + $0x18] sm:$0xff]
        %v186 = vld [vmem:[%s157 + $0x20] sm:$0xff]
        %v187 = vld [vmem:[%s157 + $0x28] sm:$0xff]
        %v188 = vld [vmem:[%s157 + $0x30] sm:$0xff]
        %v189 = vld [vmem:[%s157 + $0x38] sm:$0xff]
        %v190 = vld [vmem:[%s157 + $0x40] sm:$0xff]
        %v191 = vld [vmem:[%s157 + $0x48] sm:$0xff]
        %v192 = vld [vmem:[%s157 + $0x50] sm:$0xff]
        %v193 = vld [vmem:[%s157 + $0x58] sm:$0xff]
        %v194 = vld [vmem:[%s157 + $0x60] sm:$0xff]
        %v195 = vld [vmem:[%s157 + $0x68] sm:$0xff]
        %v196 = vld [vmem:[%s157 + $0x70] sm:$0xff]
        %v197 = vld [vmem:[%s157 + $0x78] sm:$0xff]
        %v198 = vld [vmem:[%s157 + $0x80] sm:$0xff]
        %v199 = vld [vmem:[%s157 + $0x88] sm:$0xff]
        %v200 = vld [vmem:[%s157 + $0x90] sm:$0xff]
        %v201 = vld [vmem:[%s157 + $0x98] sm:$0xff]
        %v202 = vld [vmem:[%s157 + $0xa0] sm:$0xff]
        %v203 = vld [vmem:[%s157 + $0xa8] sm:$0xff]
        %v204 = vld [vmem:[%s157 + $0xb0] sm:$0xff]
        %v205 = vld [vmem:[%s157 + $0xb8] sm:$0xff]
        %v206 = vld [vmem:[%s157 + $0xc0] sm:$0xff]
        %v207 = vld [vmem:[%s157 + $0xc8] sm:$0xff]
        %v208 = vld [vmem:[%s157 + $0xd0] sm:$0xff]
        %v209 = vld [vmem:[%s157 + $0xd8] sm:$0xff]
        %v210 = vld [vmem:[%s157 + $0xe0] sm:$0xff]
        %v211 = vld [vmem:[%s157 + $0xe8] sm:$0xff]
        %v212 = vld [vmem:[%s157 + $0xf0] sm:$0xff]
        %v213 = vld [vmem:[%s157 + $0xf8] sm:$0xff]
        %v214 = vld [vmem:[%s157 + $0x100] sm:$0xff]
        %v215 = vld [vmem:[%s157 + $0x108] sm:$0xff]
        %v216 = vld [vmem:[%s157 + $0x110] sm:$0xff]
        %v217 = vld [vmem:[%s157 + $0x118] sm:$0xff]
        %v218 = vld [vmem:[%s157 + $0x120] sm:$0xff]
        %v219 = vld [vmem:[%s157 + $0x128] sm:$0xff]
        %v220 = vld [vmem:[%s157 + $0x130] sm:$0xff]
        %v221 = vld [vmem:[%s157 + $0x138] sm:$0xff]
        %v222 = vld [vmem:[%s157 + $0x140] sm:$0xff]
        %v223 = vld [vmem:[%s157 + $0x148] sm:$0xff]
        %v224 = vld [vmem:[%s157 + $0x150] sm:$0xff]
        %v225 = vld [vmem:[%s157 + $0x158] sm:$0xff]
        %v226 = vld [vmem:[%s157 + $0x160] sm:$0xff]
        %v227 = vld [vmem:[%s157 + $0x168] sm:$0xff]
        %v228 = vld [vmem:[%s157 + $0x170] sm:$0xff]
        %v229 = vld [vmem:[%s157 + $0x178] sm:$0xff]
        %v230 = vld [vmem:[%s157 + $0x180] sm:$0xff]
        %v231 = vld [vmem:[%s157 + $0x188] sm:$0xff]
        %v232 = vld [vmem:[%s157 + $0x190] sm:$0xff]
        %v233 = vld [vmem:[%s157 + $0x198] sm:$0xff]
        %v234 = vld [vmem:[%s157 + $0x1a0] sm:$0xff]
        %v235 = vld [vmem:[%s157 + $0x1a8] sm:$0xff]
        %v236 = vld [vmem:[%s157 + $0x1b0] sm:$0xff]
        %v237 = vld [vmem:[%s157 + $0x1b8] sm:$0xff]
        %v238 = vld [vmem:[%s157 + $0x1c0] sm:$0xff]
        %v239 = vld [vmem:[%s157 + $0x1c8] sm:$0xff]
        %v240 = vld [vmem:[%s157 + $0x1d0] sm:$0xff]
        %v241 = vld [vmem:[%s157 + $0x1d8] sm:$0xff]
        %v242 = vld [vmem:[%s157 + $0x1e0] sm:$0xff]
        %v243 = vld [vmem:[%s157 + $0x1e8] sm:$0xff]
        %v244 = vld [vmem:[%s157 + $0x1f0] sm:$0xff]
        %v245 = vld [vmem:[%s157 + $0x1f8] sm:$0xff]
        %v246 = vld [vmem:[%s157 + $0x200] sm:$0xff]
        %v247 = vld [vmem:[%s157 + $0x208] sm:$0xff]
        %v248 = vld [vmem:[%s157 + $0x210] sm:$0xff]
        %v249 = vld [vmem:[%s157 + $0x218] sm:$0xff]
        %v250 = vld [vmem:[%s157 + $0x220] sm:$0xff]
        %v251 = vld [vmem:[%s157 + $0x228] sm:$0xff]
        %v252 = vld [vmem:[%s157 + $0x230] sm:$0xff]
        %v253 = vld [vmem:[%s157 + $0x238] sm:$0xff]
        %v254 = vld [vmem:[%s157 + $0x240] sm:$0xff]
        %v255 = vld [vmem:[%s157 + $0x248] sm:$0xff]
        %v256 = vld [vmem:[%s157 + $0x250] sm:$0xff]
        %v257 = vld [vmem:[%s157 + $0x258] sm:$0xff]
        %v258 = vld [vmem:[%s157 + $0x260] sm:$0xff]
        %v259 = vld [vmem:[%s157 + $0x268] sm:$0xff]
        %v260 = vld [vmem:[%s157 + $0x270] sm:$0xff]
        %v261 = vld [vmem:[%s157 + $0x278] sm:$0xff]
        %v262 = vld [vmem:[%s157 + $0x280] sm:$0xff]
        %v263 = vld [vmem:[%s157 + $0x288] sm:$0xff]
        %v264 = vld [vmem:[%s157 + $0x290] sm:$0xff]
        %v265 = vld [vmem:[%s157 + $0x298] sm:$0xff]
        %v266 = vld [vmem:[%s157 + $0x2a0] sm:$0xff]
        %v267 = vld [vmem:[%s157 + $0x2a8] sm:$0xff]
        %v268 = vld [vmem:[%s157 + $0x2b0] sm:$0xff]
        %v269 = vld [vmem:[%s157 + $0x2b8] sm:$0xff]
        %v270 = vld [vmem:[%s157 + $0x2c0] sm:$0xff]
        %v271 = vld [vmem:[%s157 + $0x2c8] sm:$0xff]
        %v272 = vld [vmem:[%s157 + $0x2d0] sm:$0xff]
        %v273 = vld [vmem:[%s157 + $0x2d8] sm:$0xff]
        %v274 = vld [vmem:[%s157 + $0x2e0] sm:$0xff]
        %v275 = vld [vmem:[%s157 + $0x2e8] sm:$0xff]
        %v276 = vld [vmem:[%s157 + $0x2f0] sm:$0xff]
        %v277 = vld [vmem:[%s157 + $0x2f8] sm:$0xff]
        %v278 = vld [vmem:[%s157 + $0x300] sm:$0x7f]
        %v279 = vld [vmem:[%s157 + $0x308] sm:$0x7f]
        %v280 = vld [vmem:[%s157 + $0x310] sm:$0x7f]
        %v281 = vld [vmem:[%s157 + $0x318] sm:$0x7f]
        %v282 = vld [vmem:[%s157 + $0x320] sm:$0x7f]
        %v283 = vld [vmem:[%s157 + $0x328] sm:$0x7f]
        %v284 = vld [vmem:[%s157 + $0x330] sm:$0x7f]
        %v285 = vld [vmem:[%s157 + $0x338] sm:$0x7f]
        %v286 = vld [vmem:[%s157 + $0x340] sm:$0x7f]
        %v287 = vld [vmem:[%s157 + $0x348] sm:$0x7f]
        %v288 = vld [vmem:[%s157 + $0x350] sm:$0x7f]
        %v289 = vld [vmem:[%s157 + $0x358] sm:$0x7f]
        %v290 = vld [vmem:[%s157 + $0x360] sm:$0x7f]
        %v291 = vld [vmem:[%s157 + $0x368] sm:$0x7f]
        %v292 = vld [vmem:[%s157 + $0x370] sm:$0x7f]
        %v293 = vld [vmem:[%s157 + $0x378] sm:$0x7f]
        %vm294 = vcmask 449536
        %v296 = vsel %vm294, %v181, 0
        %vm298 = vcmask 1046528
        %v300 = vsel %vm298, %v278, 0
        %v303 = vsel %vm298, %v279, 0
        %v306 = vsel %vm298, %v280, 0
        %v309 = vsel %vm298, %v281, 0
        %v312 = vsel %vm298, %v282, 0
        %v315 = vsel %vm298, %v283, 0
        %v318 = vsel %vm298, %v284, 0
        %v321 = vsel %vm298, %v285, 0
        %v324 = vsel %vm298, %v286, 0
        %v327 = vsel %vm298, %v287, 0
        %v330 = vsel %vm298, %v288, 0
        %v333 = vsel %vm298, %v289, 0
        %v336 = vsel %vm298, %v290, 0
        %v339 = vsel %vm298, %v291, 0
        %v342 = vsel %vm298, %v292, 0
        %v345 = vsel %vm298, %v293, 0
        %347 = vmatpush.msra.mxu0 0.0
        %348 = vmatpush.msra.mxu0 0.0
        %349 = vmatpush.msra.mxu0 0.0
        %350 = vmatpush.msra.mxu0 0.0
        %351 = vmatpush.msra.mxu0 0.0
        %352 = vmatpush.msra.mxu0 0.0
        %353 = vmatpush.msra.mxu0 0.0
        %354 = vmatpush.msra.mxu0 0.0
        %355 = vmatpush.msra.mxu0 0.0
        %356 = vmatpush.msra.mxu0 %v300
        %357 = vmatpush.msra.mxu0 %v262
        %358 = vmatpush.msra.mxu0 %v246
        %359 = vmatpush.msra.mxu0 %v230
        %360 = vmatpush.msra.mxu0 %v214
        %361 = vmatpush.msra.mxu0 %v198
        %362 = vmatpush.msra.mxu0 %v182
        %363 = vmatmul.f32.gmra.mxu0 %v296
        %v364 = vpop.f32.mrf.mxu0
        %v365 = vadd.f32 0.0, %v364
        %366 = vdwg.mxu0
        %367 = vmatpush.msra.mxu0 0.0
        %368 = vmatpush.msra.mxu0 0.0
        %369 = vmatpush.msra.mxu0 0.0
        %370 = vmatpush.msra.mxu0 0.0
        %371 = vmatpush.msra.mxu0 0.0
        %372 = vmatpush.msra.mxu0 0.0
        %373 = vmatpush.msra.mxu0 0.0
        %374 = vmatpush.msra.mxu0 0.0
        %375 = vmatpush.msra.mxu0 0.0
        %376 = vmatpush.msra.mxu0 %v303
        %377 = vmatpush.msra.mxu0 %v263
        %378 = vmatpush.msra.mxu0 %v247
        %379 = vmatpush.msra.mxu0 %v231
        %380 = vmatpush.msra.mxu0 %v215
        %381 = vmatpush.msra.mxu0 %v199
        %382 = vmatpush.msra.mxu0 %v183
        %383 = vmatmul.f32.gmra.mxu0 %v296
        %v384 = vpop.f32.mrf.mxu0
        %v385 = vadd.f32 0.0, %v384
        %386 = vdwg.mxu0
        %387 = vmatpush.msra.mxu0 0.0
        %388 = vmatpush.msra.mxu0 0.0
        %389 = vmatpush.msra.mxu0 0.0
        %390 = vmatpush.msra.mxu0 0.0
        %391 = vmatpush.msra.mxu0 0.0
        %392 = vmatpush.msra.mxu0 0.0
        %393 = vmatpush.msra.mxu0 0.0
        %394 = vmatpush.msra.mxu0 0.0
        %395 = vmatpush.msra.mxu0 0.0
        %396 = vmatpush.msra.mxu0 %v306
        %397 = vmatpush.msra.mxu0 %v264
        %398 = vmatpush.msra.mxu0 %v248
        %399 = vmatpush.msra.mxu0 %v232
        %400 = vmatpush.msra.mxu0 %v216
        %401 = vmatpush.msra.mxu0 %v200
        %402 = vmatpush.msra.mxu0 %v184
        %403 = vmatmul.f32.gmra.mxu0 %v296
        %v404 = vpop.f32.mrf.mxu0
        %v405 = vadd.f32 0.0, %v404
        %406 = vdwg.mxu0
        %407 = vmatpush.msra.mxu0 0.0
        %408 = vmatpush.msra.mxu0 0.0
        %409 = vmatpush.msra.mxu0 0.0
        %410 = vmatpush.msra.mxu0 0.0
        %411 = vmatpush.msra.mxu0 0.0
        %412 = vmatpush.msra.mxu0 0.0
        %413 = vmatpush.msra.mxu0 0.0
        %414 = vmatpush.msra.mxu0 0.0
        %415 = vmatpush.msra.mxu0 0.0
        %416 = vmatpush.msra.mxu0 %v309
        %417 = vmatpush.msra.mxu0 %v265
        %418 = vmatpush.msra.mxu0 %v249
        %419 = vmatpush.msra.mxu0 %v233
        %420 = vmatpush.msra.mxu0 %v217
        %421 = vmatpush.msra.mxu0 %v201
        %422 = vmatpush.msra.mxu0 %v185
        %423 = vmatmul.f32.gmra.mxu0 %v296
        %v424 = vpop.f32.mrf.mxu0
        %v425 = vadd.f32 0.0, %v424
        %426 = vdwg.mxu0
        %427 = vmatpush.msra.mxu0 0.0
        %428 = vmatpush.msra.mxu0 0.0
        %429 = vmatpush.msra.mxu0 0.0
        %430 = vmatpush.msra.mxu0 0.0
        %431 = vmatpush.msra.mxu0 0.0
        %432 = vmatpush.msra.mxu0 0.0
        %433 = vmatpush.msra.mxu0 0.0
        %434 = vmatpush.msra.mxu0 0.0
        %435 = vmatpush.msra.mxu0 0.0
        %436 = vmatpush.msra.mxu0 %v312
        %437 = vmatpush.msra.mxu0 %v266
        %438 = vmatpush.msra.mxu0 %v250
        %439 = vmatpush.msra.mxu0 %v234
        %440 = vmatpush.msra.mxu0 %v218
        %441 = vmatpush.msra.mxu0 %v202
        %442 = vmatpush.msra.mxu0 %v186
        %443 = vmatmul.f32.gmra.mxu0 %v296
        %v444 = vpop.f32.mrf.mxu0
        %v445 = vadd.f32 0.0, %v444
        %446 = vdwg.mxu0
        %447 = vmatpush.msra.mxu0 0.0
        %448 = vmatpush.msra.mxu0 0.0
        %449 = vmatpush.msra.mxu0 0.0
        %450 = vmatpush.msra.mxu0 0.0
        %451 = vmatpush.msra.mxu0 0.0
        %452 = vmatpush.msra.mxu0 0.0
        %453 = vmatpush.msra.mxu0 0.0
        %454 = vmatpush.msra.mxu0 0.0
        %455 = vmatpush.msra.mxu0 0.0
        %456 = vmatpush.msra.mxu0 %v315
        %457 = vmatpush.msra.mxu0 %v267
        %458 = vmatpush.msra.mxu0 %v251
        %459 = vmatpush.msra.mxu0 %v235
        %460 = vmatpush.msra.mxu0 %v219
        %461 = vmatpush.msra.mxu0 %v203
        %462 = vmatpush.msra.mxu0 %v187
        %463 = vmatmul.f32.gmra.mxu0 %v296
        %v464 = vpop.f32.mrf.mxu0
        %v465 = vadd.f32 0.0, %v464
        %466 = vdwg.mxu0
        %467 = vmatpush.msra.mxu0 0.0
        %468 = vmatpush.msra.mxu0 0.0
        %469 = vmatpush.msra.mxu0 0.0
        %470 = vmatpush.msra.mxu0 0.0
        %471 = vmatpush.msra.mxu0 0.0
        %472 = vmatpush.msra.mxu0 0.0
        %473 = vmatpush.msra.mxu0 0.0
        %474 = vmatpush.msra.mxu0 0.0
        %475 = vmatpush.msra.mxu0 0.0
        %476 = vmatpush.msra.mxu0 %v318
        %477 = vmatpush.msra.mxu0 %v268
        %478 = vmatpush.msra.mxu0 %v252
        %479 = vmatpush.msra.mxu0 %v236
        %480 = vmatpush.msra.mxu0 %v220
        %481 = vmatpush.msra.mxu0 %v204
        %482 = vmatpush.msra.mxu0 %v188
        %483 = vmatmul.f32.gmra.mxu0 %v296
        %v484 = vpop.f32.mrf.mxu0
        %v485 = vadd.f32 0.0, %v484
        %486 = vdwg.mxu0
        %487 = vmatpush.msra.mxu0 0.0
        %488 = vmatpush.msra.mxu0 0.0
        %489 = vmatpush.msra.mxu0 0.0
        %490 = vmatpush.msra.mxu0 0.0
        %491 = vmatpush.msra.mxu0 0.0
        %492 = vmatpush.msra.mxu0 0.0
        %493 = vmatpush.msra.mxu0 0.0
        %494 = vmatpush.msra.mxu0 0.0
        %495 = vmatpush.msra.mxu0 0.0
        %496 = vmatpush.msra.mxu0 %v321
        %497 = vmatpush.msra.mxu0 %v269
        %498 = vmatpush.msra.mxu0 %v253
        %499 = vmatpush.msra.mxu0 %v237
        %500 = vmatpush.msra.mxu0 %v221
        %501 = vmatpush.msra.mxu0 %v205
        %502 = vmatpush.msra.mxu0 %v189
        %503 = vmatmul.f32.gmra.mxu0 %v296
        %v504 = vpop.f32.mrf.mxu0
        %v505 = vadd.f32 0.0, %v504
        %506 = vdwg.mxu0
        %507 = vmatpush.msra.mxu0 0.0
        %508 = vmatpush.msra.mxu0 0.0
        %509 = vmatpush.msra.mxu0 0.0
        %510 = vmatpush.msra.mxu0 0.0
        %511 = vmatpush.msra.mxu0 0.0
        %512 = vmatpush.msra.mxu0 0.0
        %513 = vmatpush.msra.mxu0 0.0
        %514 = vmatpush.msra.mxu0 0.0
        %515 = vmatpush.msra.mxu0 0.0
        %516 = vmatpush.msra.mxu0 %v324
        %517 = vmatpush.msra.mxu0 %v270
        %518 = vmatpush.msra.mxu0 %v254
        %519 = vmatpush.msra.mxu0 %v238
        %520 = vmatpush.msra.mxu0 %v222
        %521 = vmatpush.msra.mxu0 %v206
        %522 = vmatpush.msra.mxu0 %v190
        %523 = vmatmul.f32.gmra.mxu0 %v296
        %v524 = vpop.f32.mrf.mxu0
        %v525 = vadd.f32 0.0, %v524
        %526 = vdwg.mxu0
        %527 = vmatpush.msra.mxu0 0.0
        %528 = vmatpush.msra.mxu0 0.0
        %529 = vmatpush.msra.mxu0 0.0
        %530 = vmatpush.msra.mxu0 0.0
        %531 = vmatpush.msra.mxu0 0.0
        %532 = vmatpush.msra.mxu0 0.0
        %533 = vmatpush.msra.mxu0 0.0
        %534 = vmatpush.msra.mxu0 0.0
        %535 = vmatpush.msra.mxu0 0.0
        %536 = vmatpush.msra.mxu0 %v327
        %537 = vmatpush.msra.mxu0 %v271
        %538 = vmatpush.msra.mxu0 %v255
        %539 = vmatpush.msra.mxu0 %v239
        %540 = vmatpush.msra.mxu0 %v223
        %541 = vmatpush.msra.mxu0 %v207
        %542 = vmatpush.msra.mxu0 %v191
        %543 = vmatmul.f32.gmra.mxu0 %v296
        %v544 = vpop.f32.mrf.mxu0
        %v545 = vadd.f32 0.0, %v544
        %546 = vdwg.mxu0
        %547 = vmatpush.msra.mxu0 0.0
        %548 = vmatpush.msra.mxu0 0.0
        %549 = vmatpush.msra.mxu0 0.0
        %550 = vmatpush.msra.mxu0 0.0
        %551 = vmatpush.msra.mxu0 0.0
        %552 = vmatpush.msra.mxu0 0.0
        %553 = vmatpush.msra.mxu0 0.0
        %554 = vmatpush.msra.mxu0 0.0
        %555 = vmatpush.msra.mxu0 0.0
        %556 = vmatpush.msra.mxu0 %v330
        %557 = vmatpush.msra.mxu0 %v272
        %558 = vmatpush.msra.mxu0 %v256
        %559 = vmatpush.msra.mxu0 %v240
        %560 = vmatpush.msra.mxu0 %v224
        %561 = vmatpush.msra.mxu0 %v208
        %562 = vmatpush.msra.mxu0 %v192
        %563 = vmatmul.f32.gmra.mxu0 %v296
        %v564 = vpop.f32.mrf.mxu0
        %v565 = vadd.f32 0.0, %v564
        %566 = vdwg.mxu0
        %567 = vmatpush.msra.mxu0 0.0
        %568 = vmatpush.msra.mxu0 0.0
        %569 = vmatpush.msra.mxu0 0.0
        %570 = vmatpush.msra.mxu0 0.0
        %571 = vmatpush.msra.mxu0 0.0
        %572 = vmatpush.msra.mxu0 0.0
        %573 = vmatpush.msra.mxu0 0.0
        %574 = vmatpush.msra.mxu0 0.0
        %575 = vmatpush.msra.mxu0 0.0
        %576 = vmatpush.msra.mxu0 %v333
        %577 = vmatpush.msra.mxu0 %v273
        %578 = vmatpush.msra.mxu0 %v257
        %579 = vmatpush.msra.mxu0 %v241
        %580 = vmatpush.msra.mxu0 %v225
        %581 = vmatpush.msra.mxu0 %v209
        %582 = vmatpush.msra.mxu0 %v193
        %583 = vmatmul.f32.gmra.mxu0 %v296
        %v584 = vpop.f32.mrf.mxu0
        %v585 = vadd.f32 0.0, %v584
        %586 = vdwg.mxu0
        %587 = vmatpush.msra.mxu0 0.0
        %588 = vmatpush.msra.mxu0 0.0
        %589 = vmatpush.msra.mxu0 0.0
        %590 = vmatpush.msra.mxu0 0.0
        %591 = vmatpush.msra.mxu0 0.0
        %592 = vmatpush.msra.mxu0 0.0
        %593 = vmatpush.msra.mxu0 0.0
        %594 = vmatpush.msra.mxu0 0.0
        %595 = vmatpush.msra.mxu0 0.0
        %596 = vmatpush.msra.mxu0 %v336
        %597 = vmatpush.msra.mxu0 %v274
        %598 = vmatpush.msra.mxu0 %v258
        %599 = vmatpush.msra.mxu0 %v242
        %600 = vmatpush.msra.mxu0 %v226
        %601 = vmatpush.msra.mxu0 %v210
        %602 = vmatpush.msra.mxu0 %v194
        %603 = vmatmul.f32.gmra.mxu0 %v296
        %v604 = vpop.f32.mrf.mxu0
        %v605 = vadd.f32 0.0, %v604
        %606 = vdwg.mxu0
        %607 = vmatpush.msra.mxu0 0.0
        %608 = vmatpush.msra.mxu0 0.0
        %609 = vmatpush.msra.mxu0 0.0
        %610 = vmatpush.msra.mxu0 0.0
        %611 = vmatpush.msra.mxu0 0.0
        %612 = vmatpush.msra.mxu0 0.0
        %613 = vmatpush.msra.mxu0 0.0
        %614 = vmatpush.msra.mxu0 0.0
        %615 = vmatpush.msra.mxu0 0.0
        %616 = vmatpush.msra.mxu0 %v339
        %617 = vmatpush.msra.mxu0 %v275
        %618 = vmatpush.msra.mxu0 %v259
        %619 = vmatpush.msra.mxu0 %v243
        %620 = vmatpush.msra.mxu0 %v227
        %621 = vmatpush.msra.mxu0 %v211
        %622 = vmatpush.msra.mxu0 %v195
        %623 = vmatmul.f32.gmra.mxu0 %v296
        %v624 = vpop.f32.mrf.mxu0
        %v625 = vadd.f32 0.0, %v624
        %626 = vdwg.mxu0
        %627 = vmatpush.msra.mxu0 0.0
        %628 = vmatpush.msra.mxu0 0.0
        %629 = vmatpush.msra.mxu0 0.0
        %630 = vmatpush.msra.mxu0 0.0
        %631 = vmatpush.msra.mxu0 0.0
        %632 = vmatpush.msra.mxu0 0.0
        %633 = vmatpush.msra.mxu0 0.0
        %634 = vmatpush.msra.mxu0 0.0
        %635 = vmatpush.msra.mxu0 0.0
        %636 = vmatpush.msra.mxu0 %v342
        %637 = vmatpush.msra.mxu0 %v276
        %638 = vmatpush.msra.mxu0 %v260
        %639 = vmatpush.msra.mxu0 %v244
        %640 = vmatpush.msra.mxu0 %v228
        %641 = vmatpush.msra.mxu0 %v212
        %642 = vmatpush.msra.mxu0 %v196
        %643 = vmatmul.f32.gmra.mxu0 %v296
        %v644 = vpop.f32.mrf.mxu0
        %v645 = vadd.f32 0.0, %v644
        %646 = vdwg.mxu0
        %647 = vmatpush.msra.mxu0 0.0
        %648 = vmatpush.msra.mxu0 0.0
        %649 = vmatpush.msra.mxu0 0.0
        %650 = vmatpush.msra.mxu0 0.0
        %651 = vmatpush.msra.mxu0 0.0
        %652 = vmatpush.msra.mxu0 0.0
        %653 = vmatpush.msra.mxu0 0.0
        %654 = vmatpush.msra.mxu0 0.0
        %655 = vmatpush.msra.mxu0 0.0
        %656 = vmatpush.msra.mxu0 %v345
        %657 = vmatpush.msra.mxu0 %v277
        %658 = vmatpush.msra.mxu0 %v261
        %659 = vmatpush.msra.mxu0 %v245
        %660 = vmatpush.msra.mxu0 %v229
        %661 = vmatpush.msra.mxu0 %v213
        %662 = vmatpush.msra.mxu0 %v197
        %663 = vmatmul.f32.gmra.mxu0 %v296
        %v664 = vpop.f32.mrf.mxu0
        %v665 = vadd.f32 0.0, %v664
        %666 = vdwg.mxu0
        %v683 = vrot.slane %v385, 4
        %v684 = vrot.slane %v425, 4
        %v685 = vrot.slane %v465, 4
        %v686 = vrot.slane %v505, 4
        %v687 = vrot.slane %v545, 4
        %v688 = vrot.slane %v585, 4
        %v689 = vrot.slane %v625, 4
        %v690 = vrot.slane %v665, 4
        %vm691 = vcmask 1043456
        %v692 = vsel %vm691, %v365, %v683
        %v693 = vsel %vm691, %v405, %v684
        %v694 = vsel %vm691, %v445, %v685
        %v695 = vsel %vm691, %v485, %v686
        %v696 = vsel %vm691, %v525, %v687
        %v697 = vsel %vm691, %v565, %v688
        %v698 = vsel %vm691, %v605, %v689
        %v699 = vsel %vm691, %v645, %v690
        %708 = vst [vmem:[%s178] sm:$0xff] %v692
        %709 = vst [vmem:[%s178 + $0x8] sm:$0xff] %v693
        %710 = vst [vmem:[%s178 + $0x10] sm:$0xff] %v694
        %711 = vst [vmem:[%s178 + $0x18] sm:$0xff] %v695
        %712 = vst [vmem:[%s178 + $0x20] sm:$0xff] %v696
        %713 = vst [vmem:[%s178 + $0x28] sm:$0xff] %v697
        %714 = vst [vmem:[%s178 + $0x30] sm:$0xff] %v698
        %715 = vst [vmem:[%s178 + $0x38] sm:$0xff] %v699
        %s716 = sand.u32 %s75, 1
        %s717 = scalar_lea.sflag [#allocation4], %s716
        %s718 = sand.u32 %s75, 1
        %s719 = smul.addr %s718, 64
        %s720 = scalar_lea.vmem [#allocation7], %s719
        // Predicated region
        $region37: #{tpu_custom_call.1} parent=27 // pred_check
          %p721 = pneg %p85
        $region38: #{tpu_custom_call.1} parent=27 // pred_check_branch
          %723 = sbr.rel (%p721) target = $region40
        $region39: #{tpu_custom_call.1} parent=27 // pred_region
          %s724 = smul.u32 16, %s20
          %726 = vsyncadd %s717, 0
          %s727 = smul.addr %s724, 4
          %s728 = scalar_lea.hbm %s2, %s727
          %s730 = sshll.u32 %s720, 4
          %s731 = int_to_ptr.vmem [resolvable:$true] %s730
          %s732 = sshll.u32 %s728, 4
          %s733 = int_to_ptr.hbm [resolvable:$true] %s732
          %735 = dma.vmem_to_hbm [thread:$0]  %s731, 1024, %s733, %s717
        $region40: #{tpu_custom_call.1} parent=27 // pred_fallthru
          _
      $region28: #{tpu_custom_call.1} parent=5 // pred_fallthru
        _
      %p736 = scmp.le.s32.totalorder 2, %s15
      // Predicated region
      $region41: #{tpu_custom_call.1} parent=5 // pred_check
        %p737 = pneg %p736
      $region42: #{tpu_custom_call.1} parent=5 // pred_check_branch
        %739 = sbr.rel (%p737) target = $region44
      $region43: #{tpu_custom_call.1} parent=5 // pred_region
        %s740 = ssub.s32 %s15, 2
        // Predicated region
        $region45: #{tpu_custom_call.1} parent=43 // pred_check
          %p741 = pneg %p91
        $region46: #{tpu_custom_call.1} parent=43 // pred_check_branch
          %743 = sbr.rel (%p741) target = $region48
        $region47: #{tpu_custom_call.1} parent=43 // pred_region
          %s744 = sand.u32 %s76, 1
          %s745 = scalar_lea.sflag [#allocation4], %s744
          %s746 = sand.u32 %s76, 1
          %s747 = smul.addr %s746, 64
          %s748 = scalar_lea.vmem [#allocation7], %s747
          %750 = dma.done %s745, 1024
        $region48: #{tpu_custom_call.1} parent=43 // pred_fallthru
          _
      $region44: #{tpu_custom_call.1} parent=5 // pred_fallthru
        _
    $region6: #{tpu_custom_call.1} parent=1 // loop_footer
      %s19 = sadd.s32 1, %s15
    $region7: #{tpu_custom_call.1} parent=1 // loop_footer_branch
      %14 = sbr.rel target = $region3
    $region8: #{tpu_custom_call.1} parent=1 // loop_exit
      _
    %751 = vsyncpa [#allocation3], 1
    %s752 = scalar_lea.sflag [#allocation3], 1
    %753 = vsyncpa %s752, 1
    %754 = vsyncpa [#allocation6], 1
    %s755 = scalar_lea.sflag [#allocation6], 1
    %756 = vsyncpa %s755, 1
    %757 = vsyncpa [#allocation4], 1
    %s758 = scalar_lea.sflag [#allocation4], 1
    %759 = vsyncpa %s758, 1

</llo_original>
